<compile_context>
chip_gen: v7x
topology: tpu7x:2x2x1
jax: 0.10.0
libtpu: 0.0.40
codegen_flags: <defaults>
</compile_context>

<pallas_src>
import functools

import jax
import jax.numpy as jnp
from jax.experimental import pallas as pl
from jax.experimental.pallas import tpu as pltpu


# ----------------------------------------------------------------------------
# Kernel
# ----------------------------------------------------------------------------
def _patch_embed_kernel(p_ref, w_ref, peb_ref, o_ref, *, tm, n_pe):
    """One (TM, K) x (K, out_dim) MXU tile with a fused (bias + pe) add.

    p_ref  : (TM, K)            activation patch rows (flat over batch*patch)
    w_ref  : (K, out_dim)       flattened conv weight (constant index -> resident)
    peb_ref: (R, out_dim)       pre-folded pe + conv bias, resident in VMEM;
                                R is TM (whole-image tiles), patch_len (sliced
                                in-kernel with pl.ds), or 1 (bias-only row)
    o_ref  : (TM, out_dim)
    """
    acc = jnp.dot(p_ref[...], w_ref[...], preferred_element_type=jnp.float32)
    if n_pe == 1:
        acc = acc + peb_ref[...]                      # broadcasts when R == 1
    else:
        # Full pe table is resident; pick this tile's rows with a dynamic slice
        # (no per-step pe DMA).
        off = pl.multiple_of((pl.program_id(0) % n_pe) * tm, tm)
        acc = acc + peb_ref[pl.ds(off, tm), :]
    o_ref[...] = acc.astype(o_ref.dtype)


# ----------------------------------------------------------------------------
# Tiling heuristics
# ----------------------------------------------------------------------------
def _choose_tm(M, patch_len, target):
    """Pick a row tile TM.

    Constraints / preferences (in priority order):
      * M % TM == 0 and (TM % patch_len == 0 or patch_len % TM == 0), so the
        positional-embedding table can always be kept resident.
      * at least 2 grid steps (software pipeline + both v7x TensorCores),
        even number of steps preferred (megacore balance).
      * TM % 256, then TM % 16 (bf16 sublane packing / MXU row tile).
      * larger TM (fewer per-step overheads), capped by `target`.
    """
    best, best_score = None, None
    for tm in range(8, min(M, target) + 1, 8):
        if M % tm != 0:
            continue
        if not (tm % patch_len == 0 or patch_len % tm == 0):
            continue
        n = M // tm
        score = (n >= 2, n % 2 == 0, tm % 256 == 0, tm % 16 == 0, tm)
        if best_score is None or score > best_score:
            best, best_score = tm, score
    if best is not None:
        return best
    # Pathological shapes (patch_len with no usable multiple-of-8 divisor):
    # one full-array tile.  M is a multiple of patch_len so the pe handling
    # below still hits the "whole images per tile" path.
    return M


def _vmem_limit_bytes(tm, K, out_dim, peb_rows, in_itemsize, out_itemsize):
    need = (2 * tm * K * in_itemsize          # patches, double-buffered
            + 2 * K * out_dim * in_itemsize   # weight (constant index)
            + 2 * peb_rows * out_dim * 4      # pe + bias table (f32)
            + 2 * tm * out_dim * out_itemsize)  # output, double-buffered
    # Generous headroom, clamped to a value legal on every generation
    # (v7x has 64 MiB physical VMEM per TensorCore).
    return int(min(max(2 * need, 32 * 1024 * 1024), 56 * 1024 * 1024))


# ----------------------------------------------------------------------------
# Forward wrapper
# ----------------------------------------------------------------------------
def patch_embedding_forward(x, conv_w, conv_b, pe=None, *, patch_size,
                            add_pe=False, H=None, W=None,
                            compute_dtype=jnp.bfloat16, out_dtype=None,
                            target_tm=512):
    """VOLO PatchEmbedding forward (use_stem=False).

    x      : (B, C, H, W) NCHW, or (B, H*W, C) (mirrors the torch ndim!=4
             branch; pass H, W in that case).
    conv_w : (out_dim, C, ps, ps);  conv_b: (out_dim,)
    pe     : (1, patch_len, out_dim) when add_pe=True.
    compute_dtype : dtype for the MXU inputs (default bf16; accumulation is
             always f32).  Pass None for exact f32 compute.
    out_dtype : dtype of the returned tensor (default: x.dtype).
    Returns (B, patch_len, out_dim).
    """
    if x.ndim == 3:                                  # (B, HW, C) -> NCHW
        B3, _, C3 = x.shape
        x = x.transpose(0, 2, 1).reshape(B3, C3, H, W)

    B, C, Himg, Wimg = x.shape
    ps = patch_size
    assert Himg % ps == 0 and Wimg % ps == 0, "H, W must be divisible by patch_size"
    out_dim = conv_w.shape[0]
    hp, wp = Himg // ps, Wimg // ps
    patch_len = hp * wp
    K = C * ps * ps
    M = B * patch_len
    out_dtype = x.dtype if out_dtype is None else out_dtype

    # --- patch extraction as a pure layout op --------------------------------
    # allow_input_fusion[0] below lets XLA fuse this producer (and the bf16
    # cast) into the Pallas input DMA, so the (M, K) patches matrix is not
    # separately materialised in / re-read from HBM.
    # TODO(synk): a K = C*ps*ps that is >128 and not 128-aligned still pays
    # physical (8,128) lane padding on the patches stream; restructuring the
    # contraction into ps accumulated matmuls of width C*ps would remove that.
    patches = (x.reshape(B, C, hp, ps, wp, ps)
                 .transpose(0, 2, 4, 1, 3, 5)
                 .reshape(M, K))
    w_mat = conv_w.reshape(out_dim, K).T             # (K, out_dim)

    if compute_dtype is not None:                    # bf16 MXU inputs everywhere
        patches = patches.astype(compute_dtype)
        w_mat = w_mat.astype(compute_dtype)

    # --- fold conv bias into the positional embedding (always resident) ------
    bias = conv_b.reshape(1, out_dim).astype(jnp.float32)
    tm = _choose_tm(M, patch_len, target_tm)
    num_tiles = M // tm

    if add_pe:
        peb_full = pe.reshape(patch_len, out_dim).astype(jnp.float32) + bias
        if tm % patch_len == 0:
            # Each tile spans whole image(s): pre-tile once -> one constant
            # (tm, out_dim) block, DMA'd a single time.
            peb_arg = jnp.tile(peb_full, (tm // patch_len, 1))
            n_pe = 1
        else:
            # patch_len % tm == 0 (guaranteed by _choose_tm): keep the FULL
            # table resident and pl.ds-slice it in-kernel.  No per-step pe DMA.
            peb_arg = peb_full
            n_pe = patch_len // tm
    else:
        peb_arg = bias                               # (1, out_dim) bias row only
        n_pe = 1

    vmem_limit = _vmem_limit_bytes(
        tm, K, out_dim, peb_arg.shape[0],
        jnp.dtype(patches.dtype).itemsize, jnp.dtype(out_dtype).itemsize)

    kernel = functools.partial(_patch_embed_kernel, tm=tm, n_pe=n_pe)

    out = pl.pallas_call(
        kernel,
        out_shape=jax.ShapeDtypeStruct((M, out_dim), out_dtype),
        grid_spec=pltpu.PrefetchScalarGridSpec(
            num_scalar_prefetch=0,
            grid=(num_tiles,),
            in_specs=[
                pl.BlockSpec((tm, K), lambda m: (m, 0)),
                # constant block indices -> weight / pe table fetched once,
                # stay resident across the whole grid
                pl.BlockSpec((K, out_dim), lambda m: (0, 0)),
                pl.BlockSpec(peb_arg.shape, lambda m: (0, 0)),
            ],
            out_specs=pl.BlockSpec((tm, out_dim), lambda m: (m, 0)),
        ),
        compiler_params=pltpu.CompilerParams(
            # flat-M "parallel" grid -> row tiles shard across both TCs on v7x
            dimension_semantics=("parallel",),
            # fuse the patch-extraction producer into the input DMA (input 0)
            allow_input_fusion=[True, False, False],
            # explicit scoped-VMEM budget (covers v5e's 16 MiB default; the
            # constant-index blocks are otherwise still double-buffered)
            vmem_limit_bytes=vmem_limit,
        ),
    )(patches, w_mat, peb_arg)

    return out.reshape(B, patch_len, out_dim)


# ----------------------------------------------------------------------------
# Pure-JAX reference (mirrors the PyTorch module, non-stem path)
# ----------------------------------------------------------------------------
def _reference_forward(x_nchw, conv_w, conv_b, pe, patch_size, add_pe=True):
    y = jax.lax.conv_general_dilated(
        x_nchw, conv_w,
        window_strides=(patch_size, patch_size),
        padding="VALID",
        dimension_numbers=("NCHW", "OIHW", "NCHW"),
    )
    y = y + conv_b.reshape(1, -1, 1, 1)
    B, out_dim, hp, wp = y.shape
    y = y.transpose(0, 2, 3, 1).reshape(B, hp * wp, out_dim)
    if add_pe:
        y = y + pe
    return y


if __name__ == "__main__":
    # Small shapes consistent with the module: B=2, in_dim=4, H=W=16, ps=4,
    # out_dim=32 -> patch_len = 16*16 / (4*4) = 16.
    B, in_dim, Himg, Wimg = 2, 4, 16, 16
    patch_size = 4
    out_dim = 32
    patch_len = Himg * Wimg // (patch_size * patch_size)

    key = jax.random.PRNGKey(0)
    kx, kw, kb, kp = jax.random.split(key, 4)
    x = jax.random.normal(kx, (B, in_dim, Himg, Wimg), dtype=jnp.float32)
    conv_w = jax.random.normal(kw, (out_dim, in_dim, patch_size, patch_size),
                               dtype=jnp.float32) * 0.05
    conv_b = jax.random.normal(kb, (out_dim,), dtype=jnp.float32) * 0.05
    # PyTorch initializes pe to zeros; use small random values so the add path
    # is actually exercised (deterministic synthetic init).
    pe = jax.random.normal(kp, (1, patch_len, out_dim), dtype=jnp.float32) * 0.02

    ref = _reference_forward(x, conv_w, conv_b, pe, patch_size, add_pe=True)

    # 1) exact f32 path (add_pe=True, VOLO second patch embedding)
    out = patch_embedding_forward(x, conv_w, conv_b, pe, patch_size=patch_size,
                                  add_pe=True, compute_dtype=None)
    out = jax.block_until_ready(out)
    assert out.shape == (B, patch_len, out_dim)
    assert jnp.allclose(out, ref, atol=1e-4, rtol=1e-4), "mismatch (f32)"

    # 2) default path: bf16 MXU inputs, f32 accumulation
    out_bf = patch_embedding_forward(x, conv_w, conv_b, pe,
                                     patch_size=patch_size, add_pe=True)
    out_bf = jax.block_until_ready(out_bf)
    assert jnp.allclose(out_bf, ref, atol=5e-2, rtol=5e-2), "mismatch (bf16 compute)"

    # 3) bf16 output stream (halves the output HBM write)
    out_b16 = patch_embedding_forward(x, conv_w, conv_b, pe,
                                      patch_size=patch_size, add_pe=True,
                                      out_dtype=jnp.bfloat16)
    out_b16 = jax.block_until_ready(out_b16)
    assert out_b16.dtype == jnp.bfloat16
    assert jnp.allclose(out_b16.astype(jnp.float32), ref, atol=1e-1, rtol=1e-1), \
        "mismatch (bf16 output)"

    # 4) add_pe=False path (bias-only row, no zeros tensor is DMA'd)
    out_np = patch_embedding_forward(x, conv_w, conv_b, None,
                                     patch_size=patch_size, add_pe=False,
                                     compute_dtype=None)
    out_np = jax.block_until_ready(out_np)
    ref_np = _reference_forward(x, conv_w, conv_b, pe, patch_size, add_pe=False)
    assert jnp.allclose(out_np, ref_np, atol=1e-4, rtol=1e-4), "mismatch (add_pe=False)"

    # 5) 3-D (B, H*W, C) input path, mirroring the torch module's ndim != 4 branch
    x3 = x.reshape(B, in_dim, Himg * Wimg).transpose(0, 2, 1)
    out3 = patch_embedding_forward(x3, conv_w, conv_b, pe, patch_size=patch_size,
                                   add_pe=True, H=Himg, W=Wimg,
                                   compute_dtype=None)
    out3 = jax.block_until_ready(out3)
    assert jnp.allclose(out3, ref, atol=1e-4, rtol=1e-4), "mismatch (3-D input)"

    # 6) config where patch_len > TM: exercises the resident-pe in-kernel
    #    pl.ds slice (n_pe > 1) and the even-grid megacore split.
    B2, H2, W2 = 1, 32, 32
    patch_len2 = H2 * W2 // (patch_size * patch_size)     # 64
    kx2, kp2 = jax.random.split(kx)
    x2 = jax.random.normal(kx2, (B2, in_dim, H2, W2), dtype=jnp.float32)
    pe2 = jax.random.normal(kp2, (1, patch_len2, out_dim), dtype=jnp.float32) * 0.02
    out2 = patch_embedding_forward(x2, conv_w, conv_b, pe2,
                                   patch_size=patch_size, add_pe=True,
                                   compute_dtype=None)
    out2 = jax.block_until_ready(out2)
    ref2 = _reference_forward(x2, conv_w, conv_b, pe2, patch_size, add_pe=True)
    assert jnp.allclose(out2, ref2, atol=1e-4, rtol=1e-4), "mismatch (sliced pe)"

    # TODO(synk): use_stem=True branch (7x7/3x3 Conv+BN+ReLU stem) not implemented;
    # only the default non-stem patch-embedding path is covered.
    print("KERNEL_OK")
</pallas_src>

<mosaic_0001>
module attributes {stable_mosaic.version = 11 : i64} {
  func.func @_patch_embed_kernel(%arg0: i32, %arg1: memref<16x64xf32, #tpu.memory_space<vmem>>, %arg2: memref<64x32xf32, #tpu.memory_space<vmem>>, %arg3: memref<16x32xf32, #tpu.memory_space<vmem>>, %arg4: memref<16x32xf32, #tpu.memory_space<vmem>>) attributes {dimension_semantics = [#tpu.dimension_semantics<parallel>], iteration_bounds = array<i64: 2>, scalar_prefetch = 0 : i64, scratch_operands = 0 : i64, tpu.core_type = #tpu.core_type<tc>, window_params = [{transform_indices = @transform_0, window_bounds = array<i64: 16, 64>}, {pipeline_mode = #tpu.pipeline_mode<synchronous>, transform_indices = @transform_1, window_bounds = array<i64: 64, 32>}, {pipeline_mode = #tpu.pipeline_mode<synchronous>, transform_indices = @transform_2, window_bounds = array<i64: 16, 32>}, {transform_indices = @transform_3, window_bounds = array<i64: 16, 32>}]} {
    %c0 = arith.constant 0 : index
    %c0_0 = arith.constant 0 : index
    %0 = vector.load %arg1[%c0, %c0_0] : memref<16x64xf32, #tpu.memory_space<vmem>>, vector<16x64xf32>
    %c0_1 = arith.constant 0 : index
    %c0_2 = arith.constant 0 : index
    %1 = vector.load %arg2[%c0_1, %c0_2] : memref<64x32xf32, #tpu.memory_space<vmem>>, vector<64x32xf32>
    %cst = arith.constant dense<0.000000e+00> : vector<16x32xf32>
    %2 = tpu.matmul %0, %1, %cst {dimension_numbers = #tpu.dot_dimension_numbers<[1], [0], [0], [1], [0, 0, 1, 1], [], []>} : vector<16x64xf32>, vector<64x32xf32>, vector<16x32xf32> -> vector<16x32xf32>
    %c0_3 = arith.constant 0 : index
    %c0_4 = arith.constant 0 : index
    %3 = vector.load %arg3[%c0_3, %c0_4] : memref<16x32xf32, #tpu.memory_space<vmem>>, vector<16x32xf32>
    %4 = arith.addf %2, %3 : vector<16x32xf32>
    %c0_5 = arith.constant 0 : index
    %c0_6 = arith.constant 0 : index
    %5 = vector.load %arg4[%c0_5, %c0_6] : memref<16x32xf32, #tpu.memory_space<vmem>>, vector<16x32xf32>
    tpu.vector_store %arg4[%c0_5, %c0_6], %4 {strides = array<i32>} : memref<16x32xf32, #tpu.memory_space<vmem>>, vector<16x32xf32>,
    return
  }
  func.func @transform_0(%arg0: i32) -> (i32, i32) {
    %c0_i32 = arith.constant 0 : i32
    %c0_i32_0 = arith.constant 0 : i32
    return %arg0, %c0_i32 : i32, i32
  }
  func.func @transform_1(%arg0: i32) -> (i32, i32) {
    %c0_i32 = arith.constant 0 : i32
    %c0_i32_0 = arith.constant 0 : i32
    %c0_i32_1 = arith.constant 0 : i32
    return %c0_i32, %c0_i32_0 : i32, i32
  }
  func.func @transform_2(%arg0: i32) -> (i32, i32) {
    %c0_i32 = arith.constant 0 : i32
    %c0_i32_0 = arith.constant 0 : i32
    %c0_i32_1 = arith.constant 0 : i32
    return %c0_i32, %c0_i32_0 : i32, i32
  }
  func.func @transform_3(%arg0: i32) -> (i32, i32) {
    %c0_i32 = arith.constant 0 : i32
    %c0_i32_0 = arith.constant 0 : i32
    return %arg0, %c0_i32 : i32, i32
  }
}

</mosaic_0001>

<llo_original>
// kernel: tpu_custom_call.1
$region0: #{tpu_custom_call.1}
  #allocation0 [shape = 'u32[]', space=smem, size = 0x4, offset = 0x4, fixed_abs, tag = 'smem constant byte address 0x4 - core index']
  #allocation1 [shape = 'u32[144,128]{1,0:T(1,128)}', space=vmem, size = 0x12000, scoped, tag = 'internal scratch']
  %s0 = inlined_call_operand.vmem [shape: f32[32,64], index: 0, kind: input, shape index: {}]
  %s1 = inlined_call_operand.vmem [shape: f32[64,32], index: 1, kind: input, shape index: {}]
  %s2 = inlined_call_operand.vmem [shape: f32[16,32], index: 2, kind: input, shape index: {}]
  %s3 = inlined_call_operand.hbm [shape: f32[32,32], index: 3, kind: output, shape index: {}]
  %s4 = sld [smem:[#allocation0]]
  $region45: #{tpu_custom_call.1} parent=0
    _
  %s6 = ssub.s32 1, %s4
  %s7 = scalar_select 0, %s6, %s4
  $region1: #{tpu_custom_call.1} parent=0
    #allocation2 [shape = 'u8[16384]{0}', space=vmem, size = 0x4000, scoped, tag = 'output window, operand 0']
    #allocation3 [shape = 's32[2]{0}', space=sflag, size = 0x8, scoped, tag = 'scoped memory for tpu_custom_call.1']
    %8 = vsyncpa [#allocation3], 0
    %s9 = scalar_lea.sflag [#allocation3], 1
    %10 = vsyncpa %s9, 0
    loop: start=0, step=1, limit=4
    $region2: #{tpu_custom_call.1} parent=1 // loop_pre_header
      _
    $region3: #{tpu_custom_call.1} parent=1 // loop_header
      %s12 = sphi 0, %s16
      %p13 = scmp.ge.s32.totalorder %s12, 4
      %s22 = sphi 0, %s24
      %s25 = sphi 0, %s22
      %s26 = sphi 0, %s25
      %s42 = sphi 0, %s26
      %s46 = sphi 0, %s46
      %s48 = sphi 0, %s46
      %s49 = sphi 0, %s48
      %s63 = sphi 0, %s49
      %s67 = sphi 0, %s67
      %s69 = sphi 0, %s67
      %s70 = sphi 0, %s69
      %s84 = sphi 0, %s70
      %s90 = sphi 0, %s92
      %s93 = sphi 0, %s90
      %s94 = sphi 0, %s93
      %s110 = sphi 0, %s94
    $region4: #{tpu_custom_call.1} parent=1 // loop_header_branch
      %15 = sbr.rel (%p13) target = $region8
    $region5: #{tpu_custom_call.1} parent=1 // loop_body
      %s17 = ssub.s32 %s12, 1
      %s18 = ssub.s32 %s12, 2
      %s19 = sadd.s32 %s12, 1
      %s20 = ssub.s32 %s12, %s19
      %p21 = scmp.eq.s32.totalorder %s20, 0
      %s23 = sadd.s32 %s22, 1
      %s24 = scalar_select %p21, %s22, %s23
      %p27 = pneg %p21
      %p28 = scmp.eq.s32.totalorder %s12, 1
      %p29 = por %p27, %p28
      %p30 = scmp.ne.s32.totalorder %s22, %s25
      %p31 = scmp.eq.s32.totalorder %s12, 0
      %p32 = por %p30, %p31
      %p33 = scmp.ne.s32.totalorder %s22, %s25
      %p34 = scmp.eq.s32.totalorder %s17, 1
      %p35 = por %p33, %p34
      %p36 = scmp.ne.s32.totalorder %s25, %s26
      %p37 = scmp.eq.s32.totalorder %s17, 0
      %p38 = por %p36, %p37
      %p39 = scmp.ne.s32.totalorder %s25, %s26
      %p40 = scmp.eq.s32.totalorder %s18, 1
      %p41 = por %p39, %p40
      %p43 = scmp.ne.s32.totalorder %s26, %s42
      %p44 = scmp.eq.s32.totalorder %s18, 0
      %p45 = por %p43, %p44
      %s47 = sadd.s32 %s46, 1
      %p50 = scmp.eq.s32.totalorder %s12, 1
      %p51 = scmp.ne.s32.totalorder %s46, %s48
      %p52 = scmp.eq.s32.totalorder %s12, 0
      %p53 = por %p51, %p52
      %p54 = scmp.ne.s32.totalorder %s46, %s48
      %p55 = scmp.eq.s32.totalorder %s17, 1
      %p56 = por %p54, %p55
      %p57 = scmp.ne.s32.totalorder %s48, %s49
      %p58 = scmp.eq.s32.totalorder %s17, 0
      %p59 = por %p57, %p58
      %p60 = scmp.ne.s32.totalorder %s48, %s49
      %p61 = scmp.eq.s32.totalorder %s18, 1
      %p62 = por %p60, %p61
      %p64 = scmp.ne.s32.totalorder %s49, %s63
      %p65 = scmp.eq.s32.totalorder %s18, 0
      %p66 = por %p64, %p65
      %s68 = sadd.s32 %s67, 1
      %p71 = scmp.eq.s32.totalorder %s12, 1
      %p72 = scmp.ne.s32.totalorder %s67, %s69
      %p73 = scmp.eq.s32.totalorder %s12, 0
      %p74 = por %p72, %p73
      %p75 = scmp.ne.s32.totalorder %s67, %s69
      %p76 = scmp.eq.s32.totalorder %s17, 1
      %p77 = por %p75, %p76
      %p78 = scmp.ne.s32.totalorder %s69, %s70
      %p79 = scmp.eq.s32.totalorder %s17, 0
      %p80 = por %p78, %p79
      %p81 = scmp.ne.s32.totalorder %s69, %s70
      %p82 = scmp.eq.s32.totalorder %s18, 1
      %p83 = por %p81, %p82
      %p85 = scmp.ne.s32.totalorder %s70, %s84
      %p86 = scmp.eq.s32.totalorder %s18, 0
      %p87 = por %p85, %p86
      %s88 = ssub.s32 %s12, %s19
      %p89 = scmp.eq.s32.totalorder %s88, 0
      %s91 = sadd.s32 %s90, 1
      %s92 = scalar_select %p89, %s90, %s91
      %p95 = pneg %p89
      %p96 = scmp.eq.s32.totalorder %s12, 1
      %p97 = por %p95, %p96
      %p98 = scmp.ne.s32.totalorder %s90, %s93
      %p99 = scmp.eq.s32.totalorder %s12, 0
      %p100 = por %p98, %p99
      %p101 = scmp.ne.s32.totalorder %s90, %s93
      %p102 = scmp.eq.s32.totalorder %s17, 1
      %p103 = por %p101, %p102
      %p104 = scmp.ne.s32.totalorder %s93, %s94
      %p105 = scmp.eq.s32.totalorder %s17, 0
      %p106 = por %p104, %p105
      %p107 = scmp.ne.s32.totalorder %s93, %s94
      %p108 = scmp.eq.s32.totalorder %s18, 1
      %p109 = por %p107, %p108
      %p111 = scmp.ne.s32.totalorder %s94, %s110
      %p112 = scmp.eq.s32.totalorder %s18, 0
      %p113 = por %p111, %p112
      %p114 = scmp.le.s32.totalorder 1, %s12
      %p115 = scmp.lt.s32.totalorder %s12, 3
      %p116 = pnand %p114, %p115
      %p117 = pneg %p116
      // Predicated region
      $region9: #{tpu_custom_call.1} parent=5 // pred_check
        _
      $region10: #{tpu_custom_call.1} parent=5 // pred_check_branch
        %119 = sbr.rel (%p116) target = $region12
      $region11: #{tpu_custom_call.1} parent=5 // pred_region
        %s120 = ssub.s32 %s12, 1
        // Predicated region
        $region13: #{tpu_custom_call.1} parent=11 // pred_check
          %p121 = pneg %p59
        $region14: #{tpu_custom_call.1} parent=11 // pred_check_branch
          %123 = sbr.rel (%p121) target = $region16
        $region15: #{tpu_custom_call.1} parent=11 // pred_region
          _
        $region16: #{tpu_custom_call.1} parent=11 // pred_fallthru
          _
        // Predicated region
        $region17: #{tpu_custom_call.1} parent=11 // pred_check
          %p124 = pneg %p80
        $region18: #{tpu_custom_call.1} parent=11 // pred_check_branch
          %126 = sbr.rel (%p124) target = $region20
        $region19: #{tpu_custom_call.1} parent=11 // pred_region
          _
        $region20: #{tpu_custom_call.1} parent=11 // pred_fallthru
          _
      $region12: #{tpu_custom_call.1} parent=5 // pred_fallthru
        _
      %p127 = scmp.lt.s32.totalorder %s12, 2
      // Predicated region
      $region21: #{tpu_custom_call.1} parent=5 // pred_check
        %p128 = pneg %p127
      $region22: #{tpu_custom_call.1} parent=5 // pred_check_branch
        %130 = sbr.rel (%p128) target = $region24
      $region23: #{tpu_custom_call.1} parent=5 // pred_region
        // Predicated region
        $region25: #{tpu_custom_call.1} parent=23 // pred_check
          %p131 = pneg %p32
        $region26: #{tpu_custom_call.1} parent=23 // pred_check_branch
          %133 = sbr.rel (%p131) target = $region28
        $region27: #{tpu_custom_call.1} parent=23 // pred_region
          %s134 = smul.u32 2, %s12
          %p135 = scmp.lt.s32.totalorder %s134, 3
          %s136 = scalar_select %p135, %s134, 3
          %s137 = smul.addr %s136, 8
          %s138 = scalar_lea.vmem %s0, %s137
          %s139 = smul.u32 2, %s12
        $region28: #{tpu_custom_call.1} parent=23 // pred_fallthru
          _
      $region24: #{tpu_custom_call.1} parent=5 // pred_fallthru
        _
      %p140 = scmp.le.s32.totalorder 1, %s12
      %p141 = scmp.lt.s32.totalorder %s12, 3
      %p142 = pnand %p140, %p141
      %p143 = pneg %p142
      // Predicated region
      $region29: #{tpu_custom_call.1} parent=5 // pred_check
        _
      $region30: #{tpu_custom_call.1} parent=5 // pred_check_branch
        %145 = sbr.rel (%p142) target = $region32
      $region31: #{tpu_custom_call.1} parent=5 // pred_region
        %s146 = ssub.s32 %s12, 1
        %s147 = smul.u32 2, %s17
        %p148 = scmp.lt.s32.totalorder %s147, 3
        %s149 = scalar_select %p148, %s147, 3
        %s150 = smul.addr %s149, 8
        %s151 = scalar_lea.vmem %s0, %s150
        %p152 = pneg %p38
        %p153 = pneg %p35
        %p154 = pneg %p59
        %p155 = pneg %p56
        %p156 = pneg %p80
        %p157 = pneg %p77
        %p158 = pneg %p106
        %p159 = pneg %p103
        %s160 = sand.u32 %s93, 1
        %s161 = scalar_lea.sflag [#allocation3], %s160
        %s162 = sand.u32 %s93, 1
        %s163 = smul.addr %s162, 16
        %s164 = scalar_lea.vmem [#allocation2], %s163
        %s165 = smul.u32 2, %s17
        %p166 = scmp.lt.s32.totalorder %s165, 3
        %s167 = scalar_select %p166, %s165, 3
        %s168 = smul.addr %s167, 8
        %s169 = scalar_lea.vmem %s0, %s168
        %s170 = smul.u32 2, %s17
        %s171 = smul.u32 2, %s17
        %v172 = vld [vmem:[%s169] sm:$0xff]
        %v173 = vld [vmem:[%s169 + $0x8] sm:$0xff]
        %v174 = vld [vmem:[%s1] sm:$0xff]
        %v175 = vld [vmem:[%s1 + $0x8] sm:$0xff]
        %v176 = vld [vmem:[%s1 + $0x10] sm:$0xff]
        %v177 = vld [vmem:[%s1 + $0x18] sm:$0xff]
        %v178 = vld [vmem:[%s1 + $0x20] sm:$0xff]
        %v179 = vld [vmem:[%s1 + $0x28] sm:$0xff]
        %v180 = vld [vmem:[%s1 + $0x30] sm:$0xff]
        %v181 = vld [vmem:[%s1 + $0x38] sm:$0xff]
        %v182 = vld [vmem:[%s2] sm:$0xff]
        %v183 = vld [vmem:[%s2 + $0x8] sm:$0xff]
        %vm184 = vcmask 523264
        %v186 = vsel %vm184, %v172, 0
        %v189 = vsel %vm184, %v173, 0
        %191 = vmatprep.subr.mxu0 0.0
        %192 = vmatpush1.msra.mxu0 %v174
        %193 = vmatprep.subr.mxu0 0.0
        %194 = vmatpush1.msra.mxu0 %v175
        %195 = vmatprep.subr.mxu0 0.0
        %196 = vmatpush1.msra.mxu0 %v176
        %197 = vmatprep.subr.mxu0 0.0
        %198 = vmatpush1.msra.mxu0 %v177
        %199 = vmatprep.subr.mxu0 0.0
        %200 = vmatpush1.msra.mxu0 %v178
        %201 = vmatprep.subr.mxu0 0.0
        %202 = vmatpush1.msra.mxu0 %v179
        %203 = vmatprep.subr.mxu0 0.0
        %204 = vmatpush1.msra.mxu0 %v180
        %205 = vmatprep.subr.mxu0 0.0
        %206 = vmatpush1.msra.mxu0 %v181
        %207 = vmatprep.subr.mxu0 0.0
        %208 = vmatpush1.msra.mxu0 0.0
        %209 = vmatprep.subr.mxu0 0.0
        %210 = vmatpush1.msra.mxu0 0.0
        %211 = vmatprep.subr.mxu0 0.0
        %212 = vmatpush1.msra.mxu0 0.0
        %213 = vmatprep.subr.mxu0 0.0
        %214 = vmatpush1.msra.mxu0 0.0
        %215 = vmatprep.subr.mxu0 0.0
        %216 = vmatpush1.msra.mxu0 0.0
        %217 = vmatprep.subr.mxu0 0.0
        %218 = vmatpush1.msra.mxu0 0.0
        %219 = vmatprep.subr.mxu0 0.0
        %220 = vmatpush1.msra.mxu0 0.0
        %221 = vmatprep.subr.mxu0 0.0
        %222 = vmatpush1.msra.mxu0 0.0
        %223 = vmatprep.subr.mxu0 0.0
        %224 = vmatpush1.msra.mxu0 0.0
        %225 = vmatprep.subr.mxu0 0.0
        %226 = vmatpush1.msra.mxu0 0.0
        %227 = vmatprep.subr.mxu0 0.0
        %228 = vmatpush1.msra.mxu0 0.0
        %229 = vmatprep.subr.mxu0 0.0
        %230 = vmatpush1.msra.mxu0 0.0
        %231 = vmatprep.subr.mxu0 0.0
        %232 = vmatpush1.msra.mxu0 0.0
        %233 = vmatprep.subr.mxu0 0.0
        %234 = vmatpush1.msra.mxu0 0.0
        %235 = vmatprep.subr.mxu0 0.0
        %236 = vmatpush1.msra.mxu0 0.0
        %237 = vmatprep.subr.mxu0 0.0
        %238 = vmatpush1.msra.mxu0 0.0
        %239 = vmatprep.subr.mxu0 0.0
        %240 = vmatpush1.msra.mxu0 0.0
        %241 = vmatprep.subr.mxu0 0.0
        %242 = vmatpush1.msra.mxu0 0.0
        %243 = vmatprep.subr.mxu0 0.0
        %244 = vmatpush1.msra.mxu0 0.0
        %245 = vmatprep.subr.mxu0 0.0
        %246 = vmatpush1.msra.mxu0 0.0
        %247 = vmatprep.subr.mxu0 0.0
        %248 = vmatpush1.msra.mxu0 0.0
        %249 = vmatprep.subr.mxu0 0.0
        %250 = vmatpush1.msra.mxu0 0.0
        %251 = vmatprep.subr.mxu0 0.0
        %252 = vmatpush1.msra.mxu0 0.0
        %253 = vmatprep.subr.mxu0 0.0
        %254 = vmatpush1.msra.mxu0 0.0
        %255 = vmatprep.mubr.f32.mxu0 0.0
        %256 = vmatmul.mubr.f32.gmra.mrb[0].mxu0 %v186
        %v257 = vpop.f32.mrb[0].mxu0
        %v258 = vadd.f32 %v182, %v257
        %v259 = vpop.f32.mrb[0].mxu0
        %260 = vmatprep.mubr.f32.mxu0 0.0
        %261 = vmatmul.mubr.f32.gmra.mrb[0].mxu0 %v189
        %v262 = vpop.f32.mrb[0].mxu0
        %v263 = vadd.f32 %v183, %v262
        %v264 = vpop.f32.mrb[0].mxu0
        %265 = vdwg.mxu0
        %vm266 = vcmask 261120
        %267 = vst.msk [vmem:[%s164] sm:$0xff] %vm266, %v258
        %268 = vst.msk [vmem:[%s164 + $0x8] sm:$0xff] %vm266, %v263
        %s269 = sand.u32 %s93, 1
        %s270 = scalar_lea.sflag [#allocation3], %s269
        %s271 = sand.u32 %s93, 1
        %s272 = smul.addr %s271, 16
        %s273 = scalar_lea.vmem [#allocation2], %s272
        // Predicated region
        $region33: #{tpu_custom_call.1} parent=31 // pred_check
          %p274 = pneg %p103
        $region34: #{tpu_custom_call.1} parent=31 // pred_check_branch
          %276 = sbr.rel (%p274) target = $region36
        $region35: #{tpu_custom_call.1} parent=31 // pred_region
          %s277 = smul.u32 2, %s17
          %s279 = ssub.s32 256, 256
          %280 = vsyncadd %s270, %s279
          %s281 = smul.addr %s277, 128
          %s282 = scalar_lea.hbm %s3, %s281
          %s283 = sshll.u32 %s273, 4
          %s284 = int_to_ptr.vmem [resolvable:$true] %s283
          %289 = dma.vmem_to_hbm [thread:$0]  %s284, 256, %s282, %s270, 128, 128, 8
        $region36: #{tpu_custom_call.1} parent=31 // pred_fallthru
          _
      $region32: #{tpu_custom_call.1} parent=5 // pred_fallthru
        _
      %p290 = scmp.le.s32.totalorder 2, %s12
      // Predicated region
      $region37: #{tpu_custom_call.1} parent=5 // pred_check
        %p291 = pneg %p290
      $region38: #{tpu_custom_call.1} parent=5 // pred_check_branch
        %293 = sbr.rel (%p291) target = $region40
      $region39: #{tpu_custom_call.1} parent=5 // pred_region
        %s294 = ssub.s32 %s12, 2
        // Predicated region
        $region41: #{tpu_custom_call.1} parent=39 // pred_check
          %p295 = pneg %p109
        $region42: #{tpu_custom_call.1} parent=39 // pred_check_branch
          %297 = sbr.rel (%p295) target = $region44
        $region43: #{tpu_custom_call.1} parent=39 // pred_region
          %s298 = sand.u32 %s94, 1
          %s299 = scalar_lea.sflag [#allocation3], %s298
          %s300 = sand.u32 %s94, 1
          %s301 = smul.addr %s300, 16
          %s302 = scalar_lea.vmem [#allocation2], %s301
          %303 = dma.done %s299, 256
        $region44: #{tpu_custom_call.1} parent=39 // pred_fallthru
          _
      $region40: #{tpu_custom_call.1} parent=5 // pred_fallthru
        _
    $region6: #{tpu_custom_call.1} parent=1 // loop_footer
      %s16 = sadd.s32 1, %s12
    $region7: #{tpu_custom_call.1} parent=1 // loop_footer_branch
      %11 = sbr.rel target = $region3
    $region8: #{tpu_custom_call.1} parent=1 // loop_exit
      _
    %304 = vsyncpa [#allocation3], 1
    %s305 = scalar_lea.sflag [#allocation3], 1
    %306 = vsyncpa %s305, 1

</llo_original>
